<compile_context>
chip_gen: v6e
topology: v6e:2x2x1
jax: 0.10.0
libtpu: 0.0.40
codegen_flags: <defaults>
</compile_context>

<pallas_src>
import math
import functools

import numpy as np
import jax
import jax.numpy as jnp
from jax.experimental import pallas as pl
from jax.experimental.pallas import tpu as pltpu


# ---------------------------------------------------------------------------
# Small shapes consistent with the module (d_model default 512 -> scaled down)
# ---------------------------------------------------------------------------
B = 2            # batch
S = 8            # sequence length
VOCAB = 64       # vocab_size
D_MODEL = 128    # d_model (kept at 128 so the lane axis is dense)
MAX_LEN = 512    # PositionalEmbedding max_len


# ---------------------------------------------------------------------------
# Kernel: each grid step computes a (tm, D) row-block of the flattened output
# ---------------------------------------------------------------------------
def wpe_kernel(ids_ref, rhs_ref, o_ref, *, seq, vocab, block_rows):
    # rhs_ref: (vocab + seq, D) = [embedding table ; pe[:seq]]
    k = rhs_ref.shape[0]

    ids = ids_ref[...]                                              # (tm, 1) int32
    row0 = pl.program_id(0) * block_rows
    row = row0 + jax.lax.broadcasted_iota(jnp.int32, (block_rows, k), 0)
    pos = row % seq                                                 # seq position per row
    col = jax.lax.broadcasted_iota(jnp.int32, (block_rows, k), 1)   # (tm, V+S)

    # Selector with two ones per row: word-id column and (vocab + pos) column.
    # Disjoint (ids < vocab, pos+vocab >= vocab) so emb + pe in one MXU pass.
    sel = ((col == ids) | (col == (pos + vocab))).astype(rhs_ref.dtype)

    o_ref[...] = jnp.dot(sel, rhs_ref[...],
                         preferred_element_type=jnp.float32).astype(o_ref.dtype)


# ---------------------------------------------------------------------------
# Wrapper
# ---------------------------------------------------------------------------
def word_position_embedding(ids, emb_table, pe_table):
    """ids: (B, S) int32 token ids.
    emb_table: (vocab, d_model) f32.  pe_table: (max_len, d_model) f32."""
    bx, sx = ids.shape
    vocab, d_model = emb_table.shape
    bs = bx * sx

    # Shape guards for the (8,128) tiling rule at these toy sizes.
    assert bs % 8 == 0 and d_model % 128 == 0, "toy-shape tiling assumption"

    ids_flat = ids.reshape(bs, 1).astype(jnp.int32)

    # RHS = [embedding table ; positional embedding for the first S rows]
    rhs = jnp.concatenate([emb_table, pe_table[:sx]], axis=0)       # (V+S, D)
    k = vocab + sx

    # Row-block tiling of the flattened (B*S, D) output; grid=(1,) at toy sizes,
    # parallel row blocks (both v7x TCs) when B*S grows.
    tm = bs if bs <= 256 else 256
    assert bs % tm == 0

    kernel = functools.partial(wpe_kernel, seq=sx, vocab=vocab, block_rows=tm)

    cost = pl.CostEstimate(
        flops=2 * bs * k * d_model,
        bytes_accessed=ids_flat.size * 4 + rhs.size * 4 + bs * d_model * 4,
        transcendentals=0,
    )

    out_flat = pl.pallas_call(
        kernel,
        out_shape=jax.ShapeDtypeStruct((bs, d_model), emb_table.dtype),
        grid=(bs // tm,),
        in_specs=[
            pl.BlockSpec((tm, 1), lambda i: (i, 0)),       # token ids (row block)
            pl.BlockSpec((k, d_model), lambda i: (0, 0)),  # [table ; pe] (resident)
        ],
        out_specs=pl.BlockSpec((tm, d_model), lambda i: (i, 0)),
        compiler_params=pltpu.CompilerParams(
            dimension_semantics=("parallel",)),
        cost_estimate=cost,
    )(ids_flat, rhs)

    return out_flat.reshape(bx, sx, d_model)


# ---------------------------------------------------------------------------
# Parameter construction (mirrors the PyTorch __init__)
# ---------------------------------------------------------------------------
def make_positional_embedding(d_model, max_len=MAX_LEN):
    pos = np.arange(max_len, dtype=np.float32)[:, None]
    div = np.exp(np.arange(0, d_model, 2, dtype=np.float32)
                 * -(math.log(10000.0) / d_model))
    pe = np.zeros((max_len, d_model), dtype=np.float32)
    pe[:, 0::2] = np.sin(pos * div)
    pe[:, 1::2] = np.cos(pos * div)
    return jnp.asarray(pe)


def init_params(key):
    emb_table = jax.random.normal(key, (VOCAB, D_MODEL), jnp.float32)
    pe_table = make_positional_embedding(D_MODEL, MAX_LEN)
    return emb_table, pe_table


# ---------------------------------------------------------------------------
# Pure-JAX reference mirroring the PyTorch forward
# ---------------------------------------------------------------------------
def word_position_embedding_ref(ids, emb_table, pe_table):
    a = emb_table[ids]                      # nn.Embedding lookup -> (B, S, D)
    b = pe_table[: ids.shape[1]]            # PE sliced to seq len -> (S, D)
    return a + b[None, :, :]


if __name__ == "__main__":
    key = jax.random.PRNGKey(0)
    k_ids, k_emb = jax.random.split(key)

    ids = jax.random.randint(k_ids, (B, S), 0, VOCAB, dtype=jnp.int32)
    emb_table, pe_table = init_params(k_emb)

    out = word_position_embedding(ids, emb_table, pe_table)
    out = jax.block_until_ready(out)

    ref = word_position_embedding_ref(ids, emb_table, pe_table)
    assert out.shape == (B, S, D_MODEL)
    assert jnp.allclose(out, ref, atol=1e-5, rtol=1e-5), "mismatch vs reference"

    print("KERNEL_OK")
</pallas_src>

<mosaic_0001>
module attributes {stable_mosaic.version = 11 : i64} {
  func.func @wpe_kernel(%arg0: i32, %arg1: memref<16x1xi32, #tpu.memory_space<vmem>>, %arg2: memref<72x128xf32, #tpu.memory_space<vmem>>, %arg3: memref<16x128xf32, #tpu.memory_space<vmem>>) attributes {dimension_semantics = [#tpu.dimension_semantics<parallel>], iteration_bounds = array<i64: 1>, scalar_prefetch = 0 : i64, scratch_operands = 0 : i64, tpu.core_type = #tpu.core_type<tc>, window_params = [{transform_indices = @transform_0, window_bounds = array<i64: 16, 1>}, {pipeline_mode = #tpu.pipeline_mode<synchronous>, transform_indices = @transform_1, window_bounds = array<i64: 72, 128>}, {transform_indices = @transform_2, window_bounds = array<i64: 16, 128>}]} {
    %c0 = arith.constant 0 : index
    %c0_0 = arith.constant 0 : index
    %0 = vector.load %arg1[%c0, %c0_0] : memref<16x1xi32, #tpu.memory_space<vmem>>, vector<16x1xi32>
    %c16_i32 = arith.constant 16 : i32
    %1 = arith.muli %arg0, %c16_i32 : i32
    %2 = tpu.iota {dimensions = array<i32: 0>} : vector<16x72xi32>
    %3 = vector.broadcast %1 : i32 to vector<16x72xi32>
    %4 = arith.addi %3, %2 : vector<16x72xi32>
    %c8_i32 = arith.constant 8 : i32
    %c0_i32 = arith.constant 0 : i32
    %5 = arith.cmpi eq, %c8_i32, %c0_i32 : i32
    %c1_i32 = arith.constant 1 : i32
    %6 = arith.select %5, %c1_i32, %c8_i32 : i32
    %7 = vector.broadcast %6 : i32 to vector<16x72xi32>
    %8 = arith.remsi %4, %7 : vector<16x72xi32>
    %c0_i32_1 = arith.constant 0 : i32
    %9 = vector.broadcast %c0_i32_1 : i32 to vector<16x72xi32>
    %10 = arith.cmpi ne, %8, %9 : vector<16x72xi32>
    %c0_i32_2 = arith.constant 0 : i32
    %11 = vector.broadcast %c0_i32_2 : i32 to vector<16x72xi32>
    %12 = arith.cmpi slt, %8, %11 : vector<16x72xi32>
    %c0_i32_3 = arith.constant 0 : i32
    %13 = arith.cmpi slt, %6, %c0_i32_3 : i32
    %14 = vector.broadcast %13 : i1 to vector<16x72xi1>
    %15 = vector.broadcast %14 : vector<16x72xi1> to vector<16x72xi1>
    %16 = arith.xori %12, %15 : vector<16x72xi1>
    %17 = arith.andi %16, %10 : vector<16x72xi1>
    %18 = vector.broadcast %6 : i32 to vector<16x72xi32>
    %19 = arith.addi %8, %18 : vector<16x72xi32>
    %20 = arith.select %17, %19, %8 : vector<16x72xi1>, vector<16x72xi32>
    %21 = tpu.iota {dimensions = array<i32: 1>} : vector<16x72xi32>
    %22 = vector.broadcast %0 : vector<16x1xi32> to vector<16x72xi32>
    %23 = arith.cmpi eq, %21, %22 : vector<16x72xi32>
    %c64_i32 = arith.constant 64 : i32
    %24 = vector.broadcast %c64_i32 : i32 to vector<16x72xi32>
    %25 = arith.addi %20, %24 : vector<16x72xi32>
    %26 = arith.cmpi eq, %21, %25 : vector<16x72xi32>
    %27 = arith.ori %23, %26 : vector<16x72xi1>
    %28 = arith.extui %27 : vector<16x72xi1> to vector<16x72xi32>
    %29 = arith.sitofp %28 : vector<16x72xi32> to vector<16x72xf32>
    %c0_4 = arith.constant 0 : index
    %c0_5 = arith.constant 0 : index
    %30 = vector.load %arg2[%c0_4, %c0_5] : memref<72x128xf32, #tpu.memory_space<vmem>>, vector<72x128xf32>
    %cst = arith.constant dense<0.000000e+00> : vector<16x128xf32>
    %31 = tpu.matmul %29, %30, %cst {dimension_numbers = #tpu.dot_dimension_numbers<[1], [0], [0], [1], [0, 0, 1, 1], [], []>} : vector<16x72xf32>, vector<72x128xf32>, vector<16x128xf32> -> vector<16x128xf32>
    %c0_6 = arith.constant 0 : index
    %c0_7 = arith.constant 0 : index
    %32 = vector.load %arg3[%c0_6, %c0_7] : memref<16x128xf32, #tpu.memory_space<vmem>>, vector<16x128xf32>
    tpu.vector_store %arg3[%c0_6, %c0_7], %31 {strides = array<i32>} : memref<16x128xf32, #tpu.memory_space<vmem>>, vector<16x128xf32>,
    return
  }
  func.func @transform_0(%arg0: i32) -> (i32, i32) {
    %c0_i32 = arith.constant 0 : i32
    %c0_i32_0 = arith.constant 0 : i32
    return %arg0, %c0_i32 : i32, i32
  }
  func.func @transform_1(%arg0: i32) -> (i32, i32) {
    %c0_i32 = arith.constant 0 : i32
    %c0_i32_0 = arith.constant 0 : i32
    %c0_i32_1 = arith.constant 0 : i32
    return %c0_i32, %c0_i32_0 : i32, i32
  }
  func.func @transform_2(%arg0: i32) -> (i32, i32) {
    %c0_i32 = arith.constant 0 : i32
    %c0_i32_0 = arith.constant 0 : i32
    return %arg0, %c0_i32 : i32, i32
  }
}

</mosaic_0001>

<llo_original>
// kernel: tpu_custom_call.1
$region0: #{tpu_custom_call.1}
  #allocation0 [shape = 'u32[]', space=smem, size = 0x4, offset = 0x4, fixed_abs, tag = 'smem constant byte address 0x4 - core index']
  #allocation1 [shape = 'u32[144,128]{1,0:T(1,128)}', space=vmem, size = 0x12000, scoped, tag = 'internal scratch']
  %s0 = inlined_call_operand.vmem [shape: s32[16,1], index: 0, kind: input, shape index: {}]
  %s1 = inlined_call_operand.hbm [shape: f32[72,128], index: 1, kind: input, shape index: {}]
  %s2 = inlined_call_operand.hbm [shape: f32[16,128], index: 2, kind: output, shape index: {}]
  %s3 = sld [smem:[#allocation0]]
  $region22: #{tpu_custom_call.1} parent=0
    _
  %s5 = ssub.s32 1, %s3
  %s6 = scalar_select 0, %s5, %s3
  $region1: #{tpu_custom_call.1} parent=0
    #allocation2 [shape = 'u8[36864]{0}', space=vmem, size = 0x9000, scoped, tag = 'input window, operand 1, single buffered']
    #allocation3 [shape = 's32[1]{0}', space=sflag, size = 0x4, scoped, tag = 'scoped memory for tpu_custom_call.1']
    #allocation4 [shape = 's32[1]{0}', space=sflag, size = 0x4, scoped, tag = 'scoped memory for tpu_custom_call.1']
    #allocation5 [shape = 'u8[8192]{0}', space=vmem, size = 0x2000, scoped, tag = 'output window, operand 0, single buffered']
    %7 = vsyncpa [#allocation3], 0
    %8 = vsyncpa [#allocation4], 0
    // Predicated region
    $region2: #{tpu_custom_call.1} parent=1 // pred_check
      _
    $region3: #{tpu_custom_call.1} parent=1 // pred_check_branch
      %10 = sbr.rel (0) target = $region5
    $region4: #{tpu_custom_call.1} parent=1 // pred_region
      _
    $region5: #{tpu_custom_call.1} parent=1 // pred_fallthru
      _
    // Predicated region
    $region6: #{tpu_custom_call.1} parent=1 // pred_check
      _
    $region7: #{tpu_custom_call.1} parent=1 // pred_check_branch
      %12 = sbr.rel (0) target = $region9
    $region8: #{tpu_custom_call.1} parent=1 // pred_region
      %s14 = ssub.s32 1152, 1152
      %15 = vsyncadd [#allocation3], %s14
      %s16 = sshll.u32 [#allocation2], 4
      %s17 = int_to_ptr.vmem [resolvable:$true] %s16
      %22 = dma.hbm_to_vmem [thread:$0]  %s1, 1152, %s17, [#allocation3], 128, 128, 8
    $region9: #{tpu_custom_call.1} parent=1 // pred_fallthru
      _
    // Predicated region
    $region10: #{tpu_custom_call.1} parent=1 // pred_check
      _
    $region11: #{tpu_custom_call.1} parent=1 // pred_check_branch
      %24 = sbr.rel (0) target = $region13
    $region12: #{tpu_custom_call.1} parent=1 // pred_region
      %25 = dma.done [#allocation3], 1152
    $region13: #{tpu_custom_call.1} parent=1 // pred_fallthru
      _
    %v26 = vld [vmem:[%s0] sm:$0xff]
    %v27 = vld [vmem:[%s0 + $0x8] sm:$0xff]
    %s28 = smul.u32 0, 16
    %v29 = vlaneseq
    %v30 = vshrl.u32 %v29, 7
    %v31 = vadd.s32 %v30, 8
    %v32 = vstv %s28
    %v33 = vadd.s32 %v32, %v30
    %v34 = vadd.s32 %v32, %v31
    %vm35 = vcmp.lt.s32.totalorder %v33, 0
    %v36 = vsub.s32 0, %v33
    %v37 = vsel %vm35, %v36, %v33
    %v38 = vshrl.u32 %v37, 3
    %v39 = vand.u32 %v37, 7
    %v40 = vsub.s32 0, %v39
    %v41 = vsel %vm35, %v40, %v39
    %vm42 = vcmp.lt.s32.totalorder %v34, 0
    %v43 = vsub.s32 0, %v34
    %v44 = vsel %vm42, %v43, %v34
    %v45 = vshrl.u32 %v44, 3
    %v46 = vand.u32 %v44, 7
    %v47 = vsub.s32 0, %v46
    %v48 = vsel %vm42, %v47, %v46
    %vm49 = vcmp.ne.s32.totalorder %v41, 0
    %vm50 = vcmp.ne.s32.totalorder %v48, 0
    %vm51 = vcmp.lt.s32.totalorder %v41, 0
    %vm52 = vcmp.lt.s32.totalorder %v48, 0
    %vm53 = vmand %vm51, %vm49
    %vm54 = vmand %vm52, %vm50
    %v55 = vadd.s32 %v41, 8
    %v56 = vadd.s32 %v48, 8
    %v57 = vsel %vm53, %v55, %v41
    %v58 = vsel %vm54, %v56, %v48
    %v59 = vlaneseq
    %v60 = vand.u32 %v59, 127
    %61 = vset.pattern.permute.xlu0 0
    %62 = vperm.xlu0 %61, %v26
    %v63 = vpop.permute.xlu0 %62
    %64 = vset.pattern.permute.xlu0 0
    %65 = vperm.xlu0 %64, %v27
    %v66 = vpop.permute.xlu0 %65
    %vm67 = vcmp.eq.s32.totalorder %v60, %v63
    %vm68 = vcmp.eq.s32.totalorder %v60, %v66
    %v69 = vadd.s32 %v57, 64
    %v70 = vadd.s32 %v58, 64
    %vm71 = vcmp.eq.s32.totalorder %v60, %v69
    %vm72 = vcmp.eq.s32.totalorder %v60, %v70
    %vm73 = vmor %vm67, %vm71
    %vm74 = vmor %vm68, %vm72
    %v75 = vsel %vm73, 1, 0
    %v76 = vsel %vm74, 1, 0
    %v77 = vcvt.s32.f32 %v75
    %v78 = vcvt.s32.f32 %v76
    %v79 = vld [vmem:[#allocation2] sm:$0xff]
    %v80 = vld [vmem:[#allocation2 + $0x8] sm:$0xff]
    %v81 = vld [vmem:[#allocation2 + $0x10] sm:$0xff]
    %v82 = vld [vmem:[#allocation2 + $0x18] sm:$0xff]
    %v83 = vld [vmem:[#allocation2 + $0x20] sm:$0xff]
    %v84 = vld [vmem:[#allocation2 + $0x28] sm:$0xff]
    %v85 = vld [vmem:[#allocation2 + $0x30] sm:$0xff]
    %v86 = vld [vmem:[#allocation2 + $0x38] sm:$0xff]
    %v87 = vld [vmem:[#allocation2 + $0x40] sm:$0xff]
    %vm88 = vcmask 588800
    %v90 = vsel %vm88, %v77, 0
    %v93 = vsel %vm88, %v78, 0
    %95 = vmatprep.subr.mxu0 0.0
    %96 = vmatpush1.msra.mxu0 0.0
    %97 = vmatprep.subr.mxu0 0.0
    %98 = vmatpush1.msra.mxu0 0.0
    %99 = vmatprep.subr.mxu0 0.0
    %100 = vmatpush1.msra.mxu0 0.0
    %101 = vmatprep.subr.mxu0 0.0
    %102 = vmatpush1.msra.mxu0 0.0
    %103 = vmatprep.subr.mxu0 0.0
    %104 = vmatpush1.msra.mxu0 0.0
    %105 = vmatprep.subr.mxu0 0.0
    %106 = vmatpush1.msra.mxu0 0.0
    %107 = vmatprep.subr.mxu0 0.0
    %108 = vmatpush1.msra.mxu0 0.0
    %109 = vmatprep.subr.mxu0 0.0
    %110 = vmatpush1.msra.mxu0 %v87
    %111 = vmatprep.subr.mxu0 0.0
    %112 = vmatpush1.msra.mxu0 %v86
    %113 = vmatprep.subr.mxu0 0.0
    %114 = vmatpush1.msra.mxu0 %v85
    %115 = vmatprep.subr.mxu0 0.0
    %116 = vmatpush1.msra.mxu0 %v84
    %117 = vmatprep.subr.mxu0 0.0
    %118 = vmatpush1.msra.mxu0 %v83
    %119 = vmatprep.subr.mxu0 0.0
    %120 = vmatpush1.msra.mxu0 %v82
    %121 = vmatprep.subr.mxu0 0.0
    %122 = vmatpush1.msra.mxu0 %v81
    %123 = vmatprep.subr.mxu0 0.0
    %124 = vmatpush1.msra.mxu0 %v80
    %125 = vmatprep.subr.mxu0 0.0
    %126 = vmatpush1.msra.mxu0 %v79
    %127 = vmatprep.subr.mxu0 0.0
    %128 = vmatpush2.msra.mxu0 0.0
    %129 = vmatprep.subr.mxu0 0.0
    %130 = vmatpush2.msra.mxu0 0.0
    %131 = vmatprep.subr.mxu0 0.0
    %132 = vmatpush2.msra.mxu0 0.0
    %133 = vmatprep.subr.mxu0 0.0
    %134 = vmatpush2.msra.mxu0 0.0
    %135 = vmatprep.subr.mxu0 0.0
    %136 = vmatpush2.msra.mxu0 0.0
    %137 = vmatprep.subr.mxu0 0.0
    %138 = vmatpush2.msra.mxu0 0.0
    %139 = vmatprep.subr.mxu0 0.0
    %140 = vmatpush2.msra.mxu0 0.0
    %141 = vmatprep.subr.mxu0 0.0
    %142 = vmatpush2.msra.mxu0 0.0
    %143 = vmatprep.subr.mxu0 0.0
    %144 = vmatpush2.msra.mxu0 0.0
    %145 = vmatprep.subr.mxu0 0.0
    %146 = vmatpush2.msra.mxu0 0.0
    %147 = vmatprep.subr.mxu0 0.0
    %148 = vmatpush2.msra.mxu0 0.0
    %149 = vmatprep.subr.mxu0 0.0
    %150 = vmatpush2.msra.mxu0 0.0
    %151 = vmatprep.subr.mxu0 0.0
    %152 = vmatpush2.msra.mxu0 0.0
    %153 = vmatprep.subr.mxu0 0.0
    %154 = vmatpush2.msra.mxu0 0.0
    %155 = vmatprep.subr.mxu0 0.0
    %156 = vmatpush2.msra.mxu0 0.0
    %157 = vmatprep.subr.mxu0 0.0
    %158 = vmatpush2.msra.mxu0 0.0
    %159 = vmatprep.mubr.f32.mxu0 0.0
    %160 = vmatmul.mubr.f32.gmra.mxu0 %v90
    %v161 = vpop.f32.mrf.mxu0
    %v162 = vadd.f32 0.0, %v161
    %v163 = vpop.f32.mrf.mxu0
    %164 = vmatprep.mubr.f32.mxu0 0.0
    %165 = vmatmul.mubr.f32.gmra.mxu0 %v93
    %v166 = vpop.f32.mrf.mxu0
    %v167 = vadd.f32 0.0, %v166
    %v168 = vpop.f32.mrf.mxu0
    %169 = vdwg.mxu0
    %170 = vst [vmem:[#allocation5] sm:$0xff] %v162
    %171 = vst [vmem:[#allocation5 + $0x8] sm:$0xff] %v167
    // Predicated region
    $region14: #{tpu_custom_call.1} parent=1 // pred_check
      _
    $region15: #{tpu_custom_call.1} parent=1 // pred_check_branch
      %173 = sbr.rel (0) target = $region17
    $region16: #{tpu_custom_call.1} parent=1 // pred_region
      %s175 = ssub.s32 256, 256
      %176 = vsyncadd [#allocation4], %s175
      %s177 = sshll.u32 [#allocation5], 4
      %s178 = int_to_ptr.vmem [resolvable:$true] %s177
      %183 = dma.vmem_to_hbm [thread:$0]  %s178, 256, %s2, [#allocation4], 128, 128, 8
    $region17: #{tpu_custom_call.1} parent=1 // pred_fallthru
      _
    // Predicated region
    $region18: #{tpu_custom_call.1} parent=1 // pred_check
      _
    $region19: #{tpu_custom_call.1} parent=1 // pred_check_branch
      %185 = sbr.rel (0) target = $region21
    $region20: #{tpu_custom_call.1} parent=1 // pred_region
      %186 = dma.done [#allocation4], 256
    $region21: #{tpu_custom_call.1} parent=1 // pred_fallthru
      _
    %187 = vsyncpa [#allocation3], 1
    %188 = vsyncpa [#allocation4], 1

</llo_original>
